<compile_context>
chip_gen: v5e
topology: v5e:2x2
jax: 0.10.0
libtpu: 0.0.40
codegen_flags: <defaults>
</compile_context>

<pallas_src>
import math
from functools import partial

import jax
import jax.numpy as jnp
from jax.experimental import pallas as pl
from jax.experimental.pallas import tpu as pltpu


def _gelu(x):
    # exact (erf) GELU, matching torch.nn.GELU() default (approximate='none')
    return 0.5 * x * (1.0 + jax.lax.erf(x * (1.0 / math.sqrt(2.0))))


def hyper_kernel(x_ref, w1_ref, b1_ref, w2_ref, b2_ref, w3_ref, b3_ref, o_ref,
                 *, S, Wo, Lb):
    """One batch-chunk (Lb = images_per_step * Ho*Wo lanes) per grid step."""
    f32 = jnp.float32
    bf16 = jnp.bfloat16
    mm = lambda a, b: jnp.dot(a, b, preferred_element_type=f32)

    # ---- conv1 (1x1) + GELU on each stride-2 polyphase plane of the input.
    w1 = w1_ref[...]
    b1 = b1_ref[...]

    def conv1(p):                                  # -> (Cmid, Lb) f32
        return _gelu(mm(w1, x_ref[p]) + b1)

    hee = conv1(0)        # y[2i,   2j  ]
    heo = conv1(1)        # y[2i,   2j+1]
    hoe = conv1(2)        # y[2i+1, 2j  ]
    hoo = conv1(3)        # y[2i+1, 2j+1]

    # Boundary masks: output row i > 0 / col j > 0 within each image.  Lane
    # order is (image, i, j), so the same masks also kill lane-roll
    # wrap-around across image / chunk boundaries.
    lane = jax.lax.broadcasted_iota(jnp.int32, (1, Lb), 1)
    col_ok = (lane % Wo) > 0
    row_ok = (lane % S) >= Wo

    def shifted(v, delta, mask):                   # v[:, s - delta] or 0
        return jnp.where(mask, pltpu.roll(v, delta, axis=1), 0.0)

    # ---- conv2 (3x3, stride 2, pad 1) computed directly at output size:
    # stack the nine taps along K so the whole conv is a single
    # (Cmid, 9*Cmid) @ (9*Cmid, Lb) MXU matmul.
    taps = jnp.concatenate([
        shifted(hoo, Wo + 1, row_ok & col_ok),     # (kh=0,kw=0): y[2i-1,2j-1]
        shifted(hoe, Wo,     row_ok),              # (0,1):       y[2i-1,2j  ]
        shifted(hoo, Wo,     row_ok),              # (0,2):       y[2i-1,2j+1]
        shifted(heo, 1,      col_ok),              # (1,0):       y[2i,  2j-1]
        hee,                                       # (1,1)
        heo,                                       # (1,2)
        shifted(hoo, 1,      col_ok),              # (2,0):       y[2i+1,2j-1]
        hoe,                                       # (2,1)
        hoo,                                       # (2,2)
    ], axis=0).astype(bf16)                        # (9*Cmid, Lb)

    g = _gelu(mm(w2_ref[...], taps) + b2_ref[...]).astype(bf16)   # (Cmid, Lb)

    # ---- conv3 (1x1): one lane-dense (Cout, Lb) store.
    o_ref[...] = (mm(w3_ref[...], g) + b3_ref[...]).astype(o_ref.dtype)


def _images_per_step(n, s):
    """How many whole images share one grid step.

    The lane block (d*s) must be a multiple of 128 (lane-dense, legal
    BlockSpec) or cover the whole batch.  Prefer >=256 lanes per step while
    keeping several grid steps for megacore parallelism / VMEM headroom.
    """
    valid = [d for d in range(1, n + 1)
             if n % d == 0 and ((d * s) % 128 == 0 or d == n)]
    for d in valid:
        if d * s >= 256:
            return d
    return valid[-1]


def hyper_structure2(x, params):
    """x: (N, Cin, H, W) f32; params: torch-layout conv weights/biases."""
    w1, b1, w2, b2, w3, b3 = params                # (O, I, kh, kw) weights
    N, Cin, H, W = x.shape
    Cmid = w1.shape[0]
    Cout = w3.shape[0]
    if (H % 2) or (W % 2):
        # TODO(synk): odd H/W needs ceil(H/2) output size + uneven phases.
        raise ValueError("hyper_structure2 kernel requires even H and W")
    Ho, Wo = H // 2, W // 2
    S = Ho * Wo
    f32, bf16 = jnp.float32, jnp.bfloat16

    Nb = _images_per_step(N, S)                    # images per grid step
    G = N // Nb
    Lb = Nb * S                                    # lanes per grid step

    # Polyphase rearrangement (once, in XLA): (4 phases, Cin, N*Ho*Wo) bf16,
    # lane order (image, i, j); phases ordered ee, eo, oe, oo.
    x4 = (x.reshape(N, Cin, Ho, 2, Wo, 2)
           .transpose(3, 5, 1, 0, 2, 4)            # (pr, pc, Cin, N, Ho, Wo)
           .reshape(4, Cin, N * S)
           .astype(bf16))

    # Weights as small dense bf16 VMEM tiles; biases stay f32.
    w1m = w1.reshape(Cmid, Cin).astype(bf16)
    b1m = b1.reshape(Cmid, 1).astype(f32)
    # (O, I, 3, 3) -> (O, kh, kw, I) -> (O, 9*I): column block k = kh*3+kw.
    w2f = jnp.transpose(w2, (0, 2, 3, 1)).reshape(Cmid, 9 * Cmid).astype(bf16)
    b2m = b2.reshape(Cmid, 1).astype(f32)
    w3m = w3.reshape(Cout, Cmid).astype(bf16)
    b3m = b3.reshape(Cout, 1).astype(f32)

    def _full(*shape):
        return pl.BlockSpec(shape, lambda g, _s=shape: (0,) * len(_s))

    kernel = partial(hyper_kernel, S=S, Wo=Wo, Lb=Lb)

    # TODO(synk): for very large images (Cin*4*S bf16 blocks near VMEM) a
    # spatial-chunk grid axis with row halos would be needed on v7x (64 MiB).
    out = pl.pallas_call(
        kernel,
        out_shape=jax.ShapeDtypeStruct((Cout, N * S), f32),
        grid=(G,),
        in_specs=[
            pl.BlockSpec((4, Cin, Lb), lambda g: (0, 0, g)),   # x phase planes
            _full(Cmid, Cin), _full(Cmid, 1),                  # conv1
            _full(Cmid, 9 * Cmid), _full(Cmid, 1),             # conv2 (fused K)
            _full(Cout, Cmid), _full(Cout, 1),                 # conv3
        ],
        out_specs=pl.BlockSpec((Cout, Lb), lambda g: (0, g)),
        compiler_params=pltpu.CompilerParams(
            dimension_semantics=("parallel",),
            vmem_limit_bytes=64 * 1024 * 1024),
    )(x4, w1m, b1m, w2f, b2m, w3m, b3m)

    return out.reshape(Cout, N, Ho, Wo).transpose(1, 0, 2, 3)


def init_params(key, cin, cout):
    """Deterministic init mimicking PyTorch Conv2d's 1/sqrt(fan_in) bound."""
    cmid = cin // 2
    ks = jax.random.split(key, 6)

    def u(k, shape, fan_in):
        bound = 1.0 / math.sqrt(fan_in)
        return jax.random.uniform(k, shape, jnp.float32, -bound, bound)

    w1 = u(ks[0], (cmid, cin, 1, 1), cin)
    b1 = u(ks[1], (cmid,), cin)
    w2 = u(ks[2], (cmid, cmid, 3, 3), cmid * 9)
    b2 = u(ks[3], (cmid,), cmid * 9)
    w3 = u(ks[4], (cout, cmid, 1, 1), cmid)
    b3 = u(ks[5], (cout,), cmid)
    return w1, b1, w2, b2, w3, b3


def ref_forward(x, params):
    """Pure-JAX (XLA) reference for correctness checking."""
    w1, b1, w2, b2, w3, b3 = params
    dn = ('NCHW', 'OIHW', 'NCHW')
    y = jax.lax.conv_general_dilated(x, w1, (1, 1), 'VALID',
                                     dimension_numbers=dn)
    y = jax.nn.gelu(y + b1[None, :, None, None], approximate=False)
    y = jax.lax.conv_general_dilated(y, w2, (2, 2), ((1, 1), (1, 1)),
                                     dimension_numbers=dn)
    y = jax.nn.gelu(y + b2[None, :, None, None], approximate=False)
    y = jax.lax.conv_general_dilated(y, w3, (1, 1), 'VALID',
                                     dimension_numbers=dn)
    return y + b3[None, :, None, None]


if __name__ == "__main__":
    key = jax.random.PRNGKey(0)
    kx, kp = jax.random.split(key)

    N, Cin, H, W = 2, 16, 16, 16
    Cout = 8

    x = jax.random.normal(kx, (N, Cin, H, W), jnp.float32)
    params = init_params(kp, Cin, Cout)

    fwd = jax.jit(hyper_structure2)
    out = jax.block_until_ready(fwd(x, params))

    assert out.shape == (N, Cout, H // 2, W // 2), out.shape

    ref = ref_forward(x, params)
    # bf16 MXU operands (f32 accumulation) -> slightly looser tolerance.
    if not bool(jnp.allclose(out, ref, atol=2e-2, rtol=2e-2)):
        raise AssertionError("Pallas kernel output mismatches JAX reference")

    print("KERNEL_OK")
</pallas_src>

<mosaic_0001>
module attributes {stable_mosaic.version = 11 : i64} {
  func.func @hyper_kernel(%arg0: i32, %arg1: memref<4x16x128xbf16, #tpu.memory_space<vmem>>, %arg2: memref<8x16xbf16, #tpu.memory_space<vmem>>, %arg3: memref<8x1xf32, #tpu.memory_space<vmem>>, %arg4: memref<8x72xbf16, #tpu.memory_space<vmem>>, %arg5: memref<8x1xf32, #tpu.memory_space<vmem>>, %arg6: memref<8x8xbf16, #tpu.memory_space<vmem>>, %arg7: memref<8x1xf32, #tpu.memory_space<vmem>>, %arg8: memref<8x128xf32, #tpu.memory_space<vmem>>) attributes {dimension_semantics = [#tpu.dimension_semantics<parallel>], iteration_bounds = array<i64: 1>, scalar_prefetch = 0 : i64, scratch_operands = 0 : i64, tpu.core_type = #tpu.core_type<tc>, window_params = [{transform_indices = @transform_0, window_bounds = array<i64: 4, 16, 128>}, {pipeline_mode = #tpu.pipeline_mode<synchronous>, transform_indices = @transform_1, window_bounds = array<i64: 8, 16>}, {pipeline_mode = #tpu.pipeline_mode<synchronous>, transform_indices = @transform_2, window_bounds = array<i64: 8, 1>}, {pipeline_mode = #tpu.pipeline_mode<synchronous>, transform_indices = @transform_3, window_bounds = array<i64: 8, 72>}, {pipeline_mode = #tpu.pipeline_mode<synchronous>, transform_indices = @transform_4, window_bounds = array<i64: 8, 1>}, {pipeline_mode = #tpu.pipeline_mode<synchronous>, transform_indices = @transform_5, window_bounds = array<i64: 8, 8>}, {pipeline_mode = #tpu.pipeline_mode<synchronous>, transform_indices = @transform_6, window_bounds = array<i64: 8, 1>}, {transform_indices = @transform_7, window_bounds = array<i64: 8, 128>}]} {
    %c0 = arith.constant 0 : index
    %c0_0 = arith.constant 0 : index
    %0 = vector.load %arg2[%c0, %c0_0] : memref<8x16xbf16, #tpu.memory_space<vmem>>, vector<8x16xbf16>
    %c0_1 = arith.constant 0 : index
    %c0_2 = arith.constant 0 : index
    %1 = vector.load %arg3[%c0_1, %c0_2] : memref<8x1xf32, #tpu.memory_space<vmem>>, vector<8x1xf32>
    %c0_3 = arith.constant 0 : index
    %c0_4 = arith.constant 0 : index
    %c0_5 = arith.constant 0 : index
    %2 = vector.load %arg1[%c0_3, %c0_4, %c0_5] : memref<4x16x128xbf16, #tpu.memory_space<vmem>>, vector<1x16x128xbf16>
    %3 = vector.shape_cast %2 : vector<1x16x128xbf16> to vector<16x128xbf16>
    %cst = arith.constant dense<0.000000e+00> : vector<8x128xf32>
    %4 = tpu.matmul %0, %3, %cst {dimension_numbers = #tpu.dot_dimension_numbers<[1], [0], [0], [1], [0, 0, 1, 1], [], []>} : vector<8x16xbf16>, vector<16x128xbf16>, vector<8x128xf32> -> vector<8x128xf32>
    %5 = vector.broadcast %1 : vector<8x1xf32> to vector<8x128xf32>
    %6 = arith.addf %4, %5 : vector<8x128xf32>
    %cst_6 = arith.constant 5.000000e-01 : f32
    %7 = vector.broadcast %cst_6 : f32 to vector<8x128xf32>
    %8 = arith.mulf %7, %6 : vector<8x128xf32>
    %cst_7 = arith.constant 0.707106769 : f32
    %9 = vector.broadcast %cst_7 : f32 to vector<8x128xf32>
    %10 = arith.mulf %6, %9 : vector<8x128xf32>
    %11 = math.erf %10 : vector<8x128xf32>
    %cst_8 = arith.constant 1.000000e+00 : f32
    %12 = vector.broadcast %cst_8 : f32 to vector<8x128xf32>
    %13 = arith.addf %12, %11 : vector<8x128xf32>
    %14 = arith.mulf %8, %13 : vector<8x128xf32>
    %c1 = arith.constant 1 : index
    %c0_9 = arith.constant 0 : index
    %c0_10 = arith.constant 0 : index
    %15 = vector.load %arg1[%c1, %c0_9, %c0_10] : memref<4x16x128xbf16, #tpu.memory_space<vmem>>, vector<1x16x128xbf16>
    %16 = vector.shape_cast %15 : vector<1x16x128xbf16> to vector<16x128xbf16>
    %cst_11 = arith.constant dense<0.000000e+00> : vector<8x128xf32>
    %17 = tpu.matmul %0, %16, %cst_11 {dimension_numbers = #tpu.dot_dimension_numbers<[1], [0], [0], [1], [0, 0, 1, 1], [], []>} : vector<8x16xbf16>, vector<16x128xbf16>, vector<8x128xf32> -> vector<8x128xf32>
    %18 = vector.broadcast %1 : vector<8x1xf32> to vector<8x128xf32>
    %19 = arith.addf %17, %18 : vector<8x128xf32>
    %cst_12 = arith.constant 5.000000e-01 : f32
    %20 = vector.broadcast %cst_12 : f32 to vector<8x128xf32>
    %21 = arith.mulf %20, %19 : vector<8x128xf32>
    %cst_13 = arith.constant 0.707106769 : f32
    %22 = vector.broadcast %cst_13 : f32 to vector<8x128xf32>
    %23 = arith.mulf %19, %22 : vector<8x128xf32>
    %24 = math.erf %23 : vector<8x128xf32>
    %cst_14 = arith.constant 1.000000e+00 : f32
    %25 = vector.broadcast %cst_14 : f32 to vector<8x128xf32>
    %26 = arith.addf %25, %24 : vector<8x128xf32>
    %27 = arith.mulf %21, %26 : vector<8x128xf32>
    %c2 = arith.constant 2 : index
    %c0_15 = arith.constant 0 : index
    %c0_16 = arith.constant 0 : index
    %28 = vector.load %arg1[%c2, %c0_15, %c0_16] : memref<4x16x128xbf16, #tpu.memory_space<vmem>>, vector<1x16x128xbf16>
    %29 = vector.shape_cast %28 : vector<1x16x128xbf16> to vector<16x128xbf16>
    %cst_17 = arith.constant dense<0.000000e+00> : vector<8x128xf32>
    %30 = tpu.matmul %0, %29, %cst_17 {dimension_numbers = #tpu.dot_dimension_numbers<[1], [0], [0], [1], [0, 0, 1, 1], [], []>} : vector<8x16xbf16>, vector<16x128xbf16>, vector<8x128xf32> -> vector<8x128xf32>
    %31 = vector.broadcast %1 : vector<8x1xf32> to vector<8x128xf32>
    %32 = arith.addf %30, %31 : vector<8x128xf32>
    %cst_18 = arith.constant 5.000000e-01 : f32
    %33 = vector.broadcast %cst_18 : f32 to vector<8x128xf32>
    %34 = arith.mulf %33, %32 : vector<8x128xf32>
    %cst_19 = arith.constant 0.707106769 : f32
    %35 = vector.broadcast %cst_19 : f32 to vector<8x128xf32>
    %36 = arith.mulf %32, %35 : vector<8x128xf32>
    %37 = math.erf %36 : vector<8x128xf32>
    %cst_20 = arith.constant 1.000000e+00 : f32
    %38 = vector.broadcast %cst_20 : f32 to vector<8x128xf32>
    %39 = arith.addf %38, %37 : vector<8x128xf32>
    %40 = arith.mulf %34, %39 : vector<8x128xf32>
    %c3 = arith.constant 3 : index
    %c0_21 = arith.constant 0 : index
    %c0_22 = arith.constant 0 : index
    %41 = vector.load %arg1[%c3, %c0_21, %c0_22] : memref<4x16x128xbf16, #tpu.memory_space<vmem>>, vector<1x16x128xbf16>
    %42 = vector.shape_cast %41 : vector<1x16x128xbf16> to vector<16x128xbf16>
    %cst_23 = arith.constant dense<0.000000e+00> : vector<8x128xf32>
    %43 = tpu.matmul %0, %42, %cst_23 {dimension_numbers = #tpu.dot_dimension_numbers<[1], [0], [0], [1], [0, 0, 1, 1], [], []>} : vector<8x16xbf16>, vector<16x128xbf16>, vector<8x128xf32> -> vector<8x128xf32>
    %44 = vector.broadcast %1 : vector<8x1xf32> to vector<8x128xf32>
    %45 = arith.addf %43, %44 : vector<8x128xf32>
    %cst_24 = arith.constant 5.000000e-01 : f32
    %46 = vector.broadcast %cst_24 : f32 to vector<8x128xf32>
    %47 = arith.mulf %46, %45 : vector<8x128xf32>
    %cst_25 = arith.constant 0.707106769 : f32
    %48 = vector.broadcast %cst_25 : f32 to vector<8x128xf32>
    %49 = arith.mulf %45, %48 : vector<8x128xf32>
    %50 = math.erf %49 : vector<8x128xf32>
    %cst_26 = arith.constant 1.000000e+00 : f32
    %51 = vector.broadcast %cst_26 : f32 to vector<8x128xf32>
    %52 = arith.addf %51, %50 : vector<8x128xf32>
    %53 = arith.mulf %47, %52 : vector<8x128xf32>
    %54 = tpu.iota {dimensions = array<i32: 1>} : vector<1x128xi32>
    %c8_i32 = arith.constant 8 : i32
    %c0_i32 = arith.constant 0 : i32
    %55 = arith.cmpi eq, %c8_i32, %c0_i32 : i32
    %c1_i32 = arith.constant 1 : i32
    %56 = arith.select %55, %c1_i32, %c8_i32 : i32
    %57 = vector.broadcast %56 : i32 to vector<1x128xi32>
    %58 = arith.remsi %54, %57 : vector<1x128xi32>
    %c0_i32_27 = arith.constant 0 : i32
    %59 = vector.broadcast %c0_i32_27 : i32 to vector<1x128xi32>
    %60 = arith.cmpi ne, %58, %59 : vector<1x128xi32>
    %c0_i32_28 = arith.constant 0 : i32
    %61 = vector.broadcast %c0_i32_28 : i32 to vector<1x128xi32>
    %62 = arith.cmpi slt, %58, %61 : vector<1x128xi32>
    %c0_i32_29 = arith.constant 0 : i32
    %63 = arith.cmpi slt, %56, %c0_i32_29 : i32
    %64 = vector.broadcast %63 : i1 to vector<1x128xi1>
    %65 = vector.broadcast %64 : vector<1x128xi1> to vector<1x128xi1>
    %66 = arith.xori %62, %65 : vector<1x128xi1>
    %67 = arith.andi %66, %60 : vector<1x128xi1>
    %68 = vector.broadcast %56 : i32 to vector<1x128xi32>
    %69 = arith.addi %58, %68 : vector<1x128xi32>
    %70 = arith.select %67, %69, %58 : vector<1x128xi1>, vector<1x128xi32>
    %c0_i32_30 = arith.constant 0 : i32
    %71 = vector.broadcast %c0_i32_30 : i32 to vector<1x128xi32>
    %72 = arith.cmpi sgt, %70, %71 : vector<1x128xi32>
    %c64_i32 = arith.constant 64 : i32
    %c0_i32_31 = arith.constant 0 : i32
    %73 = arith.cmpi eq, %c64_i32, %c0_i32_31 : i32
    %c1_i32_32 = arith.constant 1 : i32
    %74 = arith.select %73, %c1_i32_32, %c64_i32 : i32
    %75 = vector.broadcast %74 : i32 to vector<1x128xi32>
    %76 = arith.remsi %54, %75 : vector<1x128xi32>
    %c0_i32_33 = arith.constant 0 : i32
    %77 = vector.broadcast %c0_i32_33 : i32 to vector<1x128xi32>
    %78 = arith.cmpi ne, %76, %77 : vector<1x128xi32>
    %c0_i32_34 = arith.constant 0 : i32
    %79 = vector.broadcast %c0_i32_34 : i32 to vector<1x128xi32>
    %80 = arith.cmpi slt, %76, %79 : vector<1x128xi32>
    %c0_i32_35 = arith.constant 0 : i32
    %81 = arith.cmpi slt, %74, %c0_i32_35 : i32
    %82 = vector.broadcast %81 : i1 to vector<1x128xi1>
    %83 = vector.broadcast %82 : vector<1x128xi1> to vector<1x128xi1>
    %84 = arith.xori %80, %83 : vector<1x128xi1>
    %85 = arith.andi %84, %78 : vector<1x128xi1>
    %86 = vector.broadcast %74 : i32 to vector<1x128xi32>
    %87 = arith.addi %76, %86 : vector<1x128xi32>
    %88 = arith.select %85, %87, %76 : vector<1x128xi1>, vector<1x128xi32>
    %c8_i32_36 = arith.constant 8 : i32
    %89 = vector.broadcast %c8_i32_36 : i32 to vector<1x128xi32>
    %90 = arith.cmpi sge, %88, %89 : vector<1x128xi32>
    %91 = arith.andi %90, %72 : vector<1x128xi1>
    %c9_i32 = arith.constant 9 : i32
    %92 = tpu.dynamic_rotate %53 by %c9_i32 dim 1 : vector<8x128xf32>, i32 -> vector<8x128xf32>
    %cst_37 = arith.constant 0.000000e+00 : f32
    %93 = vector.shape_cast %91 : vector<1x128xi1> to vector<1x128xi1>
    %94 = vector.broadcast %93 : vector<1x128xi1> to vector<8x128xi1>
    %95 = vector.broadcast %cst_37 : f32 to vector<8x128xf32>
    %96 = arith.select %94, %92, %95 : vector<8x128xi1>, vector<8x128xf32>
    %c8_i32_38 = arith.constant 8 : i32
    %97 = tpu.dynamic_rotate %40 by %c8_i32_38 dim 1 : vector<8x128xf32>, i32 -> vector<8x128xf32>
    %cst_39 = arith.constant 0.000000e+00 : f32
    %98 = vector.shape_cast %90 : vector<1x128xi1> to vector<1x128xi1>
    %99 = vector.broadcast %98 : vector<1x128xi1> to vector<8x128xi1>
    %100 = vector.broadcast %cst_39 : f32 to vector<8x128xf32>
    %101 = arith.select %99, %97, %100 : vector<8x128xi1>, vector<8x128xf32>
    %c8_i32_40 = arith.constant 8 : i32
    %102 = tpu.dynamic_rotate %53 by %c8_i32_40 dim 1 : vector<8x128xf32>, i32 -> vector<8x128xf32>
    %cst_41 = arith.constant 0.000000e+00 : f32
    %103 = vector.shape_cast %90 : vector<1x128xi1> to vector<1x128xi1>
    %104 = vector.broadcast %103 : vector<1x128xi1> to vector<8x128xi1>
    %105 = vector.broadcast %cst_41 : f32 to vector<8x128xf32>
    %106 = arith.select %104, %102, %105 : vector<8x128xi1>, vector<8x128xf32>
    %c1_i32_42 = arith.constant 1 : i32
    %107 = tpu.dynamic_rotate %27 by %c1_i32_42 dim 1 : vector<8x128xf32>, i32 -> vector<8x128xf32>
    %cst_43 = arith.constant 0.000000e+00 : f32
    %108 = vector.shape_cast %72 : vector<1x128xi1> to vector<1x128xi1>
    %109 = vector.broadcast %108 : vector<1x128xi1> to vector<8x128xi1>
    %110 = vector.broadcast %cst_43 : f32 to vector<8x128xf32>
    %111 = arith.select %109, %107, %110 : vector<8x128xi1>, vector<8x128xf32>
    %c1_i32_44 = arith.constant 1 : i32
    %112 = tpu.dynamic_rotate %53 by %c1_i32_44 dim 1 : vector<8x128xf32>, i32 -> vector<8x128xf32>
    %cst_45 = arith.constant 0.000000e+00 : f32
    %113 = vector.shape_cast %72 : vector<1x128xi1> to vector<1x128xi1>
    %114 = vector.broadcast %113 : vector<1x128xi1> to vector<8x128xi1>
    %115 = vector.broadcast %cst_45 : f32 to vector<8x128xf32>
    %116 = arith.select %114, %112, %115 : vector<8x128xi1>, vector<8x128xf32>
    %117 = tpu.concatenate %96, %101, %106, %111, %14, %27, %116, %40, %53 in 0 : vector<8x128xf32>, vector<8x128xf32>, vector<8x128xf32>, vector<8x128xf32>, vector<8x128xf32>, vector<8x128xf32>, vector<8x128xf32>, vector<8x128xf32>, vector<8x128xf32> -> vector<72x128xf32>
    %118 = arith.truncf %117 : vector<72x128xf32> to vector<72x128xbf16>
    %c0_46 = arith.constant 0 : index
    %c0_47 = arith.constant 0 : index
    %119 = vector.load %arg4[%c0_46, %c0_47] : memref<8x72xbf16, #tpu.memory_space<vmem>>, vector<8x72xbf16>
    %cst_48 = arith.constant dense<0.000000e+00> : vector<8x128xf32>
    %120 = tpu.matmul %119, %118, %cst_48 {dimension_numbers = #tpu.dot_dimension_numbers<[1], [0], [0], [1], [0, 0, 1, 1], [], []>} : vector<8x72xbf16>, vector<72x128xbf16>, vector<8x128xf32> -> vector<8x128xf32>
    %c0_49 = arith.constant 0 : index
    %c0_50 = arith.constant 0 : index
    %121 = vector.load %arg5[%c0_49, %c0_50] : memref<8x1xf32, #tpu.memory_space<vmem>>, vector<8x1xf32>
    %122 = vector.broadcast %121 : vector<8x1xf32> to vector<8x128xf32>
    %123 = arith.addf %120, %122 : vector<8x128xf32>
    %cst_51 = arith.constant 5.000000e-01 : f32
    %124 = vector.broadcast %cst_51 : f32 to vector<8x128xf32>
    %125 = arith.mulf %124, %123 : vector<8x128xf32>
    %cst_52 = arith.constant 0.707106769 : f32
    %126 = vector.broadcast %cst_52 : f32 to vector<8x128xf32>
    %127 = arith.mulf %123, %126 : vector<8x128xf32>
    %128 = math.erf %127 : vector<8x128xf32>
    %cst_53 = arith.constant 1.000000e+00 : f32
    %129 = vector.broadcast %cst_53 : f32 to vector<8x128xf32>
    %130 = arith.addf %129, %128 : vector<8x128xf32>
    %131 = arith.mulf %125, %130 : vector<8x128xf32>
    %132 = arith.truncf %131 : vector<8x128xf32> to vector<8x128xbf16>
    %c0_54 = arith.constant 0 : index
    %c0_55 = arith.constant 0 : index
    %133 = vector.load %arg6[%c0_54, %c0_55] : memref<8x8xbf16, #tpu.memory_space<vmem>>, vector<8x8xbf16>
    %cst_56 = arith.constant dense<0.000000e+00> : vector<8x128xf32>
    %134 = tpu.matmul %133, %132, %cst_56 {dimension_numbers = #tpu.dot_dimension_numbers<[1], [0], [0], [1], [0, 0, 1, 1], [], []>} : vector<8x8xbf16>, vector<8x128xbf16>, vector<8x128xf32> -> vector<8x128xf32>
    %c0_57 = arith.constant 0 : index
    %c0_58 = arith.constant 0 : index
    %135 = vector.load %arg7[%c0_57, %c0_58] : memref<8x1xf32, #tpu.memory_space<vmem>>, vector<8x1xf32>
    %136 = vector.broadcast %135 : vector<8x1xf32> to vector<8x128xf32>
    %137 = arith.addf %134, %136 : vector<8x128xf32>
    %c0_59 = arith.constant 0 : index
    %c0_60 = arith.constant 0 : index
    %138 = vector.load %arg8[%c0_59, %c0_60] : memref<8x128xf32, #tpu.memory_space<vmem>>, vector<8x128xf32>
    tpu.vector_store %arg8[%c0_59, %c0_60], %137 {strides = array<i32>} : memref<8x128xf32, #tpu.memory_space<vmem>>, vector<8x128xf32>,
    return
  }
  func.func @transform_0(%arg0: i32) -> (i32, i32, i32) {
    %c0_i32 = arith.constant 0 : i32
    %c0_i32_0 = arith.constant 0 : i32
    %c0_i32_1 = arith.constant 0 : i32
    return %c0_i32, %c0_i32_0, %arg0 : i32, i32, i32
  }
  func.func @transform_1(%arg0: i32) -> (i32, i32) {
    %c0_i32 = arith.constant 0 : i32
    %c0_i32_0 = arith.constant 0 : i32
    %c0_i32_1 = arith.constant 0 : i32
    return %c0_i32, %c0_i32_0 : i32, i32
  }
  func.func @transform_2(%arg0: i32) -> (i32, i32) {
    %c0_i32 = arith.constant 0 : i32
    %c0_i32_0 = arith.constant 0 : i32
    %c0_i32_1 = arith.constant 0 : i32
    return %c0_i32, %c0_i32_0 : i32, i32
  }
  func.func @transform_3(%arg0: i32) -> (i32, i32) {
    %c0_i32 = arith.constant 0 : i32
    %c0_i32_0 = arith.constant 0 : i32
    %c0_i32_1 = arith.constant 0 : i32
    return %c0_i32, %c0_i32_0 : i32, i32
  }
  func.func @transform_4(%arg0: i32) -> (i32, i32) {
    %c0_i32 = arith.constant 0 : i32
    %c0_i32_0 = arith.constant 0 : i32
    %c0_i32_1 = arith.constant 0 : i32
    return %c0_i32, %c0_i32_0 : i32, i32
  }
  func.func @transform_5(%arg0: i32) -> (i32, i32) {
    %c0_i32 = arith.constant 0 : i32
    %c0_i32_0 = arith.constant 0 : i32
    %c0_i32_1 = arith.constant 0 : i32
    return %c0_i32, %c0_i32_0 : i32, i32
  }
  func.func @transform_6(%arg0: i32) -> (i32, i32) {
    %c0_i32 = arith.constant 0 : i32
    %c0_i32_0 = arith.constant 0 : i32
    %c0_i32_1 = arith.constant 0 : i32
    return %c0_i32, %c0_i32_0 : i32, i32
  }
  func.func @transform_7(%arg0: i32) -> (i32, i32) {
    %c0_i32 = arith.constant 0 : i32
    %c0_i32_0 = arith.constant 0 : i32
    return %c0_i32, %arg0 : i32, i32
  }
}

</mosaic_0001>

<llo_original>
// kernel: hyper_structure2.1
$region0: #{hyper_structure2.1}
  #allocation0 [shape = 'u32[]', space=smem, size = 0x4, offset = 0x4, fixed_abs, tag = 'smem constant byte address 0x4 - core index']
  #allocation1 [shape = 'u32[72,128]{1,0:T(1,128)}', space=vmem, size = 0x9000, scoped, tag = 'internal scratch']
  %s0 = inlined_call_operand.vmem [shape: bf16[4,16,128], index: 0, kind: input, shape index: {}]
  %s1 = inlined_call_operand.vmem [shape: bf16[8,16], index: 1, kind: input, shape index: {}]
  %s2 = inlined_call_operand.vmem [shape: f32[8,1], index: 2, kind: input, shape index: {}]
  %s3 = inlined_call_operand.vmem [shape: bf16[8,72], index: 3, kind: input, shape index: {}]
  %s4 = inlined_call_operand.vmem [shape: f32[8,1], index: 4, kind: input, shape index: {}]
  %s5 = inlined_call_operand.vmem [shape: bf16[8,8], index: 5, kind: input, shape index: {}]
  %s6 = inlined_call_operand.vmem [shape: f32[8,1], index: 6, kind: input, shape index: {}]
  %s7 = inlined_call_operand.vmem [shape: f32[8,128], index: 7, kind: output, shape index: {}]
  %s8 = sld [smem:[#allocation0]]
  $region38: #{hyper_structure2.1} parent=0
    _
  %s10 = ssub.s32 1, %s8
  %s11 = scalar_select 0, %s10, %s8
  // Predicated region
  $region2: #{hyper_structure2.1} parent=0 // pred_check
    _
  $region3: #{hyper_structure2.1} parent=0 // pred_check_branch
    %13 = sbr.rel (0) target = $region5
  $region4: #{hyper_structure2.1} parent=0 // pred_region
    _
  $region5: #{hyper_structure2.1} parent=0 // pred_fallthru
    _
  // Predicated region
  $region6: #{hyper_structure2.1} parent=0 // pred_check
    _
  $region7: #{hyper_structure2.1} parent=0 // pred_check_branch
    %15 = sbr.rel (0) target = $region9
  $region8: #{hyper_structure2.1} parent=0 // pred_region
    _
  $region9: #{hyper_structure2.1} parent=0 // pred_fallthru
    _
  // Predicated region
  $region10: #{hyper_structure2.1} parent=0 // pred_check
    _
  $region11: #{hyper_structure2.1} parent=0 // pred_check_branch
    %17 = sbr.rel (0) target = $region13
  $region12: #{hyper_structure2.1} parent=0 // pred_region
    _
  $region13: #{hyper_structure2.1} parent=0 // pred_fallthru
    _
  // Predicated region
  $region14: #{hyper_structure2.1} parent=0 // pred_check
    _
  $region15: #{hyper_structure2.1} parent=0 // pred_check_branch
    %19 = sbr.rel (0) target = $region17
  $region16: #{hyper_structure2.1} parent=0 // pred_region
    _
  $region17: #{hyper_structure2.1} parent=0 // pred_fallthru
    _
  // Predicated region
  $region18: #{hyper_structure2.1} parent=0 // pred_check
    _
  $region19: #{hyper_structure2.1} parent=0 // pred_check_branch
    %21 = sbr.rel (0) target = $region21
  $region20: #{hyper_structure2.1} parent=0 // pred_region
    _
  $region21: #{hyper_structure2.1} parent=0 // pred_fallthru
    _
  // Predicated region
  $region22: #{hyper_structure2.1} parent=0 // pred_check
    _
  $region23: #{hyper_structure2.1} parent=0 // pred_check_branch
    %23 = sbr.rel (0) target = $region25
  $region24: #{hyper_structure2.1} parent=0 // pred_region
    _
  $region25: #{hyper_structure2.1} parent=0 // pred_fallthru
    _
  // Predicated region
  $region26: #{hyper_structure2.1} parent=0 // pred_check
    _
  $region27: #{hyper_structure2.1} parent=0 // pred_check_branch
    %25 = sbr.rel (0) target = $region29
  $region28: #{hyper_structure2.1} parent=0 // pred_region
    _
  $region29: #{hyper_structure2.1} parent=0 // pred_fallthru
    _
  %v27 = vld [vmem:[%s1] sm:$0xf]
  %v28 = vld [vmem:[%s2] sm:$0xff]
  %v29 = vld [vmem:[%s0] sm:$0xf]
  %v30 = vld [vmem:[%s0 + $0x4] sm:$0xf]
  %32 = vset.pattern.permute.xlu0 0
  %33 = vperm.xlu0 %32, %v28
  %v34 = vpop.permute.xlu0 %33
  %v38 = vunpack.c.l.b16 %v29
  %v39 = vunpack.c.l.b16 %v30
  %v40 = vpack.c.b16 %v39, %v38
  %vm42 = vcmask 130048
  %v44 = vsel %vm42, %v27, 0
  %46 = vmatpush.bf16.msra.mxu0 0
  %47 = vmatpush.bf16.msra.mxu0 0
  %48 = vmatpush.bf16.msra.mxu0 0
  %49 = vmatpush.bf16.msra.mxu0 0
  %50 = vmatpush.bf16.msra.mxu0 0
  %51 = vmatpush.bf16.msra.mxu0 0
  %52 = vmatpush.bf16.msra.mxu0 0
  %53 = vmatpush.bf16.msra.mxu0 %v40
  %54 = vmatmul.bf16.gmra.mxu0 %v44
  %v55 = vpop.f32.mrf.mxu0
  %v56 = vadd.f32 %v34, %v55
  %v57 = vpop.f32.mrf.mxu0
  %58 = vdwg.mxu0
  %v59 = vmul.f32 %v56, 0.5
  %v60 = vmul.f32 %v56, 0.70710677
  %v61 = vmul.f32 %v60, %v60
  %v62 = vmin.f32 16.0, %v61
  %v63 = vmul.f32 %v62, 2.1237322e-06
  %v64 = vadd.f32 %v63, 0.00028619796
  %v65 = vmul.f32 %v62, %v64
  %v66 = vadd.f32 %v65, 0.0036580483
  %v67 = vmul.f32 %v62, %v66
  %v68 = vadd.f32 %v67, 0.05243302
  %v69 = vmul.f32 %v62, %v68
  %v70 = vadd.f32 %v69, 0.18741608
  %v71 = vmul.f32 %v62, %v70
  %v72 = vadd.f32 %v71, 1.1283791
  %v73 = vmul.f32 %v60, %v72
  %v74 = vmul.f32 %v62, 3.8918573e-05
  %v75 = vadd.f32 %v74, 0.001143296
  %v76 = vmul.f32 %v62, %v75
  %v77 = vadd.f32 %v76, 0.014752088
  %v78 = vmul.f32 %v62, %v77
  %v79 = vadd.f32 %v78, 0.112945676
  %v80 = vmul.f32 %v62, %v79
  %v81 = vadd.f32 %v80, 0.4994258
  %v82 = vmul.f32 %v62, %v81
  %v83 = vadd.f32 %v82, 1.0
  %v84 = vrcp.pop %v83
  %v85 = vmul.f32 %v83, %v84
  %v86 = vsub.f32 1.0, %v85
  %v87 = vmul.f32 %v84, %v86
  %v88 = vadd.f32 %v84, %v87
  %vm89 = vweird.f32 %v83
  %vm90 = vweird.f32 %v84
  %vm91 = vmor %vm89, %vm90
  %v92 = vsel %vm91, %v84, %v88
  %v93 = vand.u32 2147483647, %v83
  %vm94 = vcmp.eq.f32.partialorder %v93, 8.507059e+37
  %v95 = vand.u32 %v83, 2147483648
  %v96 = vor.u32 1.1754944e-38, %v95
  %v97 = vsel %vm94, %v96, %v92
  %v98 = vmul.f32 %v73, %v97
  %v99 = vmin.f32 %v98, 1.0
  %v100 = vmax.f32 %v99, -1.0
  %v101 = vadd.f32 %v100, 1.0
  %v102 = vmul.f32 %v59, %v101
  %s103 = scalar_lea.vmem %s0, 8
  %v104 = vld [vmem:[%s103] sm:$0xf]
  %v105 = vld [vmem:[%s103 + $0x4] sm:$0xf]
  %v108 = vunpack.c.l.b16 %v104
  %v109 = vunpack.c.l.b16 %v105
  %v110 = vpack.c.b16 %v109, %v108
  %112 = vmatpush.bf16.msra.mxu0 0
  %113 = vmatpush.bf16.msra.mxu0 0
  %114 = vmatpush.bf16.msra.mxu0 0
  %115 = vmatpush.bf16.msra.mxu0 0
  %116 = vmatpush.bf16.msra.mxu0 0
  %117 = vmatpush.bf16.msra.mxu0 0
  %118 = vmatpush.bf16.msra.mxu0 0
  %119 = vmatpush.bf16.msra.mxu0 %v110
  %120 = vmatmul.bf16.gmra.mxu0 %v44
  %v121 = vpop.f32.mrf.mxu0
  %v122 = vadd.f32 %v34, %v121
  %v123 = vpop.f32.mrf.mxu0
  %124 = vdwg.mxu0
  %v125 = vmul.f32 %v122, 0.5
  %v126 = vmul.f32 %v122, 0.70710677
  %v127 = vmul.f32 %v126, %v126
  %v128 = vmin.f32 16.0, %v127
  %v129 = vmul.f32 %v128, 2.1237322e-06
  %v130 = vadd.f32 %v129, 0.00028619796
  %v131 = vmul.f32 %v128, %v130
  %v132 = vadd.f32 %v131, 0.0036580483
  %v133 = vmul.f32 %v128, %v132
  %v134 = vadd.f32 %v133, 0.05243302
  %v135 = vmul.f32 %v128, %v134
  %v136 = vadd.f32 %v135, 0.18741608
  %v137 = vmul.f32 %v128, %v136
  %v138 = vadd.f32 %v137, 1.1283791
  %v139 = vmul.f32 %v126, %v138
  %v140 = vmul.f32 %v128, 3.8918573e-05
  %v141 = vadd.f32 %v140, 0.001143296
  %v142 = vmul.f32 %v128, %v141
  %v143 = vadd.f32 %v142, 0.014752088
  %v144 = vmul.f32 %v128, %v143
  %v145 = vadd.f32 %v144, 0.112945676
  %v146 = vmul.f32 %v128, %v145
  %v147 = vadd.f32 %v146, 0.4994258
  %v148 = vmul.f32 %v128, %v147
  %v149 = vadd.f32 %v148, 1.0
  %v150 = vrcp.pop %v149
  %v151 = vmul.f32 %v149, %v150
  %v152 = vsub.f32 1.0, %v151
  %v153 = vmul.f32 %v150, %v152
  %v154 = vadd.f32 %v150, %v153
  %vm155 = vweird.f32 %v149
  %vm156 = vweird.f32 %v150
  %vm157 = vmor %vm155, %vm156
  %v158 = vsel %vm157, %v150, %v154
  %v159 = vand.u32 2147483647, %v149
  %vm160 = vcmp.eq.f32.partialorder %v159, 8.507059e+37
  %v161 = vand.u32 %v149, 2147483648
  %v162 = vor.u32 1.1754944e-38, %v161
  %v163 = vsel %vm160, %v162, %v158
  %v164 = vmul.f32 %v139, %v163
  %v165 = vmin.f32 %v164, 1.0
  %v166 = vmax.f32 %v165, -1.0
  %v167 = vadd.f32 %v166, 1.0
  %v168 = vmul.f32 %v125, %v167
  %s169 = scalar_lea.vmem %s0, 16
  %v170 = vld [vmem:[%s169] sm:$0xf]
  %v171 = vld [vmem:[%s169 + $0x4] sm:$0xf]
  %v174 = vunpack.c.l.b16 %v170
  %v175 = vunpack.c.l.b16 %v171
  %v176 = vpack.c.b16 %v175, %v174
  %178 = vmatpush.bf16.msra.mxu0 0
  %179 = vmatpush.bf16.msra.mxu0 0
  %180 = vmatpush.bf16.msra.mxu0 0
  %181 = vmatpush.bf16.msra.mxu0 0
  %182 = vmatpush.bf16.msra.mxu0 0
  %183 = vmatpush.bf16.msra.mxu0 0
  %184 = vmatpush.bf16.msra.mxu0 0
  %185 = vmatpush.bf16.msra.mxu0 %v176
  %186 = vmatmul.bf16.gmra.mxu0 %v44
  %v187 = vpop.f32.mrf.mxu0
  %v188 = vadd.f32 %v34, %v187
  %v189 = vpop.f32.mrf.mxu0
  %190 = vdwg.mxu0
  %v191 = vmul.f32 %v188, 0.5
  %v192 = vmul.f32 %v188, 0.70710677
  %v193 = vmul.f32 %v192, %v192
  %v194 = vmin.f32 16.0, %v193
  %v195 = vmul.f32 %v194, 2.1237322e-06
  %v196 = vadd.f32 %v195, 0.00028619796
  %v197 = vmul.f32 %v194, %v196
  %v198 = vadd.f32 %v197, 0.0036580483
  %v199 = vmul.f32 %v194, %v198
  %v200 = vadd.f32 %v199, 0.05243302
  %v201 = vmul.f32 %v194, %v200
  %v202 = vadd.f32 %v201, 0.18741608
  %v203 = vmul.f32 %v194, %v202
  %v204 = vadd.f32 %v203, 1.1283791
  %v205 = vmul.f32 %v192, %v204
  %v206 = vmul.f32 %v194, 3.8918573e-05
  %v207 = vadd.f32 %v206, 0.001143296
  %v208 = vmul.f32 %v194, %v207
  %v209 = vadd.f32 %v208, 0.014752088
  %v210 = vmul.f32 %v194, %v209
  %v211 = vadd.f32 %v210, 0.112945676
  %v212 = vmul.f32 %v194, %v211
  %v213 = vadd.f32 %v212, 0.4994258
  %v214 = vmul.f32 %v194, %v213
  %v215 = vadd.f32 %v214, 1.0
  %v216 = vrcp.pop %v215
  %v217 = vmul.f32 %v215, %v216
  %v218 = vsub.f32 1.0, %v217
  %v219 = vmul.f32 %v216, %v218
  %v220 = vadd.f32 %v216, %v219
  %vm221 = vweird.f32 %v215
  %vm222 = vweird.f32 %v216
  %vm223 = vmor %vm221, %vm222
  %v224 = vsel %vm223, %v216, %v220
  %v225 = vand.u32 2147483647, %v215
  %vm226 = vcmp.eq.f32.partialorder %v225, 8.507059e+37
  %v227 = vand.u32 %v215, 2147483648
  %v228 = vor.u32 1.1754944e-38, %v227
  %v229 = vsel %vm226, %v228, %v224
  %v230 = vmul.f32 %v205, %v229
  %v231 = vmin.f32 %v230, 1.0
  %v232 = vmax.f32 %v231, -1.0
  %v233 = vadd.f32 %v232, 1.0
  %v234 = vmul.f32 %v191, %v233
  %s235 = scalar_lea.vmem %s0, 24
  %v236 = vld [vmem:[%s235] sm:$0xf]
  %v237 = vld [vmem:[%s235 + $0x4] sm:$0xf]
  %v240 = vunpack.c.l.b16 %v236
  %v241 = vunpack.c.l.b16 %v237
  %v242 = vpack.c.b16 %v241, %v240
  %244 = vmatpush.bf16.msra.mxu0 0
  %245 = vmatpush.bf16.msra.mxu0 0
  %246 = vmatpush.bf16.msra.mxu0 0
  %247 = vmatpush.bf16.msra.mxu0 0
  %248 = vmatpush.bf16.msra.mxu0 0
  %249 = vmatpush.bf16.msra.mxu0 0
  %250 = vmatpush.bf16.msra.mxu0 0
  %251 = vmatpush.bf16.msra.mxu0 %v242
  %252 = vmatmul.bf16.gmra.mxu0 %v44
  %v253 = vpop.f32.mrf.mxu0
  %v254 = vadd.f32 %v34, %v253
  %v255 = vpop.f32.mrf.mxu0
  %256 = vdwg.mxu0
  %v257 = vmul.f32 %v254, 0.5
  %v258 = vmul.f32 %v254, 0.70710677
  %v259 = vmul.f32 %v258, %v258
  %v260 = vmin.f32 16.0, %v259
  %v261 = vmul.f32 %v260, 2.1237322e-06
  %v262 = vadd.f32 %v261, 0.00028619796
  %v263 = vmul.f32 %v260, %v262
  %v264 = vadd.f32 %v263, 0.0036580483
  %v265 = vmul.f32 %v260, %v264
  %v266 = vadd.f32 %v265, 0.05243302
  %v267 = vmul.f32 %v260, %v266
  %v268 = vadd.f32 %v267, 0.18741608
  %v269 = vmul.f32 %v260, %v268
  %v270 = vadd.f32 %v269, 1.1283791
  %v271 = vmul.f32 %v258, %v270
  %v272 = vmul.f32 %v260, 3.8918573e-05
  %v273 = vadd.f32 %v272, 0.001143296
  %v274 = vmul.f32 %v260, %v273
  %v275 = vadd.f32 %v274, 0.014752088
  %v276 = vmul.f32 %v260, %v275
  %v277 = vadd.f32 %v276, 0.112945676
  %v278 = vmul.f32 %v260, %v277
  %v279 = vadd.f32 %v278, 0.4994258
  %v280 = vmul.f32 %v260, %v279
  %v281 = vadd.f32 %v280, 1.0
  %v282 = vrcp.pop %v281
  %v283 = vmul.f32 %v281, %v282
  %v284 = vsub.f32 1.0, %v283
  %v285 = vmul.f32 %v282, %v284
  %v286 = vadd.f32 %v282, %v285
  %vm287 = vweird.f32 %v281
  %vm288 = vweird.f32 %v282
  %vm289 = vmor %vm287, %vm288
  %v290 = vsel %vm289, %v282, %v286
  %v291 = vand.u32 2147483647, %v281
  %vm292 = vcmp.eq.f32.partialorder %v291, 8.507059e+37
  %v293 = vand.u32 %v281, 2147483648
  %v294 = vor.u32 1.1754944e-38, %v293
  %v295 = vsel %vm292, %v294, %v290
  %v296 = vmul.f32 %v271, %v295
  %v297 = vmin.f32 %v296, 1.0
  %v298 = vmax.f32 %v297, -1.0
  %v299 = vadd.f32 %v298, 1.0
  %v300 = vmul.f32 %v257, %v299
  %v301 = vlaneseq
  %v302 = vand.u32 %v301, 127
  %vm303 = vcmp.lt.s32.totalorder %v302, 0
  %v304 = vsub.s32 0, %v302
  %v305 = vsel %vm303, %v304, %v302
  %v306 = vshrl.u32 %v305, 3
  %v307 = vand.u32 %v305, 7
  %v308 = vsub.s32 0, %v307
  %v309 = vsel %vm303, %v308, %v307
  %vm310 = vcmp.ne.s32.totalorder %v309, 0
  %vm311 = vcmp.lt.s32.totalorder %v309, 0
  %vm312 = vmand %vm311, %vm310
  %v313 = vadd.s32 %v309, 8
  %v314 = vsel %vm312, %v313, %v309
  %vm315 = vcmp.gt.s32.totalorder %v314, 0
  %vm316 = vcmp.lt.s32.totalorder %v302, 0
  %v317 = vsub.s32 0, %v302
  %v318 = vsel %vm316, %v317, %v302
  %v319 = vshrl.u32 %v318, 6
  %v320 = vand.u32 %v318, 63
  %v321 = vsub.s32 0, %v320
  %v322 = vsel %vm316, %v321, %v320
  %vm323 = vcmp.ne.s32.totalorder %v322, 0
  %vm324 = vcmp.lt.s32.totalorder %v322, 0
  %vm325 = vmand %vm324, %vm323
  %v326 = vadd.s32 %v322, 64
  %v327 = vsel %vm325, %v326, %v322
  %vm328 = vcmp.ge.s32.totalorder %v327, 8
  %vm329 = vmand %vm328, %vm315
  %330 = vrot.lane.b32.xlu0 %v300, 9
  %v331 = vpop.permute.xlu0 %330
  %v332 = vsel %vm329, 1, 0
  %vm333 = vcmp.eq.s32.totalorder %v332, 1
  %v334 = vsel %vm333, %v331, 0.0
  %335 = vrot.lane.b32.xlu0 %v234, 8
  %v336 = vpop.permute.xlu0 %335
  %v337 = vsel %vm328, 1, 0
  %vm338 = vcmp.eq.s32.totalorder %v337, 1
  %v339 = vsel %vm338, %v336, 0.0
  %340 = vrot.lane.b32.xlu0 %v300, 8
  %v341 = vpop.permute.xlu0 %340
  %v342 = vsel %vm338, %v341, 0.0
  %343 = vrot.lane.b32.xlu0 %v168, 1
  %v344 = vpop.permute.xlu0 %343
  %v345 = vsel %vm315, 1, 0
  %vm346 = vcmp.eq.s32.totalorder %v345, 1
  %v347 = vsel %vm346, %v344, 0.0
  %348 = vrot.lane.b32.xlu0 %v300, 1
  %v349 = vpop.permute.xlu0 %348
  %v350 = vsel %vm346, %v349, 0.0
  %v351 = vpack.c.bf16 %v339, %v334
  %v352 = vpack.c.bf16 %v347, %v342
  %v353 = vpack.c.bf16 %v168, %v102
  %v354 = vpack.c.bf16 %v234, %v350
  %v355 = vpack.c.bf16 %v300, %v300
  %v356 = vld [vmem:[%s3] sm:$0xf]
  %v357 = vld [vmem:[%s4] sm:$0xff]
  %359 = vset.pattern.permute.xlu0 0
  %360 = vperm.xlu0 %359, %v357
  %v361 = vpop.permute.xlu0 %360
  %vm363 = vcmask 588800
  %v365 = vsel %vm363, %v356, 0
  %vm367 = vcmask 1043456
  %v369 = vsel %vm367, %v355, 0
  %371 = vmatpush.bf16.msra.mxu0 0
  %372 = vmatpush.bf16.msra.mxu0 0
  %373 = vmatpush.bf16.msra.mxu0 0
  %374 = vmatpush.bf16.msra.mxu0 %v369
  %375 = vmatpush.bf16.msra.mxu0 %v354
  %376 = vmatpush.bf16.msra.mxu0 %v353
  %377 = vmatpush.bf16.msra.mxu0 %v352
  %378 = vmatpush.bf16.msra.mxu0 %v351
  %379 = vmatmul.bf16.gmra.mxu0 %v365
  %v380 = vpop.f32.mrf.mxu0
  %v381 = vadd.f32 %v361, %v380
  %v382 = vpop.f32.mrf.mxu0
  %383 = vdwg.mxu0
  %v384 = vmul.f32 %v381, 0.5
  %v385 = vmul.f32 %v381, 0.70710677
  %v386 = vmul.f32 %v385, %v385
  %v387 = vmin.f32 16.0, %v386
  %v388 = vmul.f32 %v387, 2.1237322e-06
  %v389 = vadd.f32 %v388, 0.00028619796
  %v390 = vmul.f32 %v387, %v389
  %v391 = vadd.f32 %v390, 0.0036580483
  %v392 = vmul.f32 %v387, %v391
  %v393 = vadd.f32 %v392, 0.05243302
  %v394 = vmul.f32 %v387, %v393
  %v395 = vadd.f32 %v394, 0.18741608
  %v396 = vmul.f32 %v387, %v395
  %v397 = vadd.f32 %v396, 1.1283791
  %v398 = vmul.f32 %v385, %v397
  %v399 = vmul.f32 %v387, 3.8918573e-05
  %v400 = vadd.f32 %v399, 0.001143296
  %v401 = vmul.f32 %v387, %v400
  %v402 = vadd.f32 %v401, 0.014752088
  %v403 = vmul.f32 %v387, %v402
  %v404 = vadd.f32 %v403, 0.112945676
  %v405 = vmul.f32 %v387, %v404
  %v406 = vadd.f32 %v405, 0.4994258
  %v407 = vmul.f32 %v387, %v406
  %v408 = vadd.f32 %v407, 1.0
  %v409 = vrcp.pop %v408
  %v410 = vmul.f32 %v408, %v409
  %v411 = vsub.f32 1.0, %v410
  %v412 = vmul.f32 %v409, %v411
  %v413 = vadd.f32 %v409, %v412
  %vm414 = vweird.f32 %v408
  %vm415 = vweird.f32 %v409
  %vm416 = vmor %vm414, %vm415
  %v417 = vsel %vm416, %v409, %v413
  %v418 = vand.u32 2147483647, %v408
  %vm419 = vcmp.eq.f32.partialorder %v418, 8.507059e+37
  %v420 = vand.u32 %v408, 2147483648
  %v421 = vor.u32 1.1754944e-38, %v420
  %v422 = vsel %vm419, %v421, %v417
  %v423 = vmul.f32 %v398, %v422
  %v424 = vmin.f32 %v423, 1.0
  %v425 = vmax.f32 %v424, -1.0
  %v426 = vadd.f32 %v425, 1.0
  %v427 = vmul.f32 %v384, %v426
  %v428 = vpack.c.bf16 %v427, %v427
  %v429 = vld [vmem:[%s5] sm:$0xf]
  %v430 = vld [vmem:[%s6] sm:$0xff]
  %432 = vset.pattern.permute.xlu0 0
  %433 = vperm.xlu0 %432, %v430
  %v434 = vpop.permute.xlu0 %433
  %vm436 = vcmask 64512
  %v438 = vsel %vm436, %v429, 0
  %v441 = vsel %vm367, %v428, 0
  %443 = vmatpush.bf16.msra.mxu0 0
  %444 = vmatpush.bf16.msra.mxu0 0
  %445 = vmatpush.bf16.msra.mxu0 0
  %446 = vmatpush.bf16.msra.mxu0 0
  %447 = vmatpush.bf16.msra.mxu0 0
  %448 = vmatpush.bf16.msra.mxu0 0
  %449 = vmatpush.bf16.msra.mxu0 0
  %450 = vmatpush.bf16.msra.mxu0 %v441
  %451 = vmatmul.bf16.gmra.mxu0 %v438
  %v452 = vpop.f32.mrf.mxu0
  %v453 = vadd.f32 %v434, %v452
  %v454 = vpop.f32.mrf.mxu0
  %455 = vdwg.mxu0
  %456 = vst [vmem:[%s7] sm:$0xff] %v453
  // Predicated region
  $region30: #{hyper_structure2.1} parent=0 // pred_check
    _
  $region31: #{hyper_structure2.1} parent=0 // pred_check_branch
    %458 = sbr.rel (0) target = $region33
  $region32: #{hyper_structure2.1} parent=0 // pred_region
    _
  $region33: #{hyper_structure2.1} parent=0 // pred_fallthru
    _
  // Predicated region
  $region34: #{hyper_structure2.1} parent=0 // pred_check
    _
  $region35: #{hyper_structure2.1} parent=0 // pred_check_branch
    %460 = sbr.rel (0) target = $region37
  $region36: #{hyper_structure2.1} parent=0 // pred_region
    _
  $region37: #{hyper_structure2.1} parent=0 // pred_fallthru
    _

</llo_original>
